<compile_context>
chip_gen: v5e
topology: v5e:2x2
jax: 0.10.0
libtpu: 0.0.40
codegen_flags: <defaults>
</compile_context>

<pallas_src>
import jax
import jax.numpy as jnp
from jax.experimental import pallas as pl
from jax.experimental.pallas import tpu as pltpu


def _ane_linear_kernel(x_ref, w_ref, o_ref):
    # x_ref: (C_in, TILE_HW)   activation tile, spatial on lanes
    # w_ref: (C_out, C_in)     full weight (constant across the grid)
    # o_ref: (C_out, TILE_HW)  output tile, spatial on lanes (lane-dense store)
    o_ref[...] = jnp.dot(
        w_ref[...], x_ref[...], preferred_element_type=jnp.float32
    ).astype(o_ref.dtype)


def _round_up(v, m):
    return ((v + m - 1) // m) * m


def _sublane_padded(c, itemsize):
    # f32 tiles pad the sublane dim to 8, bf16 to 16, int8 to 32.
    return _round_up(c, max(8, 32 // max(1, itemsize)))


def _vmem_ceiling_bytes():
    # Generation-aware scoped-VMEM ceiling, leaving headroom for Mosaic's
    # internal scratch: ~48 MiB on v7x (64 MiB physical VMEM), ~96 MiB on
    # v5e/v6e (128 MiB physical). Conservative fallback if the query fails.
    try:
        cap = int(pltpu.get_tpu_info().vmem_capacity_bytes)
    except Exception:
        cap = 64 * 1024 * 1024
    if cap <= 64 * 1024 * 1024:
        return 48 * 1024 * 1024
    return 96 * 1024 * 1024


def ane_linear(x_nchw, weight, *, tile_hw=None, compute_dtype=None, out_dtype=None):
    """ANELinear / 1x1-conv forward.

    x_nchw: (N, C_in, H, W); weight: (C_out, C_in). Returns (N, C_out, H, W).
    compute_dtype: optional downcast of matmul inputs (e.g. jnp.bfloat16 on
      v6e/v7x); MXU accumulation stays f32.
    out_dtype: output dtype (default: x's original dtype). Use bf16 here too
      for the full HBM-traffic saving when the consumer tolerates it.
    """
    n, c_in, h, w = x_nchw.shape
    c_out, c_in_w = weight.shape
    assert c_in == c_in_w, "weight C_in must match input channels"

    if out_dtype is None:
        out_dtype = x_nchw.dtype
    if compute_dtype is not None:
        # NOTE: ideally upstream already produces bf16; this wrapper cast is a
        # separate XLA op and only the in-kernel traffic benefits.
        x_nchw = x_nchw.astype(compute_dtype)
        weight = weight.astype(compute_dtype)

    hw = h * w
    in_item = jnp.dtype(x_nchw.dtype).itemsize
    w_item = jnp.dtype(weight.dtype).itemsize
    out_item = jnp.dtype(out_dtype).itemsize

    # VMEM bytes per lane of tile, with padded sublane counts and per-array
    # dtypes, double-buffered (input + output pipeline buffers).
    c_in_pad = _sublane_padded(c_in, in_item)
    c_out_pad = _sublane_padded(c_out, out_item)
    bytes_per_lane = 2 * (c_in_pad * in_item + c_out_pad * out_item)

    vmem_ceiling = _vmem_ceiling_bytes()

    # ---- Tile selection: lane-dense (multiple of 128), as large as the VMEM
    # budget allows (amortizes the ~0.35 us per-grid-step overhead), capped at
    # 64K lanes and at the (lane-rounded) full spatial extent.
    if tile_hw is None:
        budget = vmem_ceiling - (8 << 20)  # headroom: weight buf + misc scratch
        max_tile = max(128, (budget // bytes_per_lane) // 128 * 128)
        tile_hw = min(65536, _round_up(hw, 128), max_tile)
    assert tile_hw % 128 == 0, "tile_hw must be a multiple of 128 (lane width)"

    # NCHW -> (N, C_in, HW): pure reshape (contiguous view), no transpose,
    # no pad, no extra HBM pass.
    x3d = x_nchw.reshape(n, c_in, hw)

    # Scoped-VMEM limit: double-buffered tiles + (tiny, padded) weight block.
    w_block_bytes = 2 * _sublane_padded(c_out, w_item) * _round_up(c_in, 128) * w_item
    vmem_need = bytes_per_lane * tile_hw + w_block_bytes
    vmem_limit = int(min(vmem_ceiling, max(vmem_need + (4 << 20), 32 << 20)))

    # Spatial-tile axis first so the big parallel axis is what gets sharded
    # across v7x's two TensorCores (N may be 1 or odd).
    grid = (pl.cdiv(hw, tile_hw), n)

    cost = pl.CostEstimate(
        flops=2 * n * hw * c_in * c_out,
        transcendentals=0,
        bytes_accessed=(n * hw * c_in * in_item
                        + c_out * c_in * w_item
                        + n * hw * c_out * out_item),
    )

    out3d = pl.pallas_call(
        _ane_linear_kernel,
        out_shape=jax.ShapeDtypeStruct((n, c_out, hw), out_dtype),
        grid_spec=pltpu.PrefetchScalarGridSpec(
            num_scalar_prefetch=0,
            grid=grid,
            in_specs=[
                # Activations: batch dim squeezed, channels on sublanes,
                # spatial on lanes. Boundary tile (hw % tile_hw != 0) is
                # handled by Pallas's masked boundary load.
                pl.BlockSpec((None, c_in, tile_hw), lambda j, b: (b, 0, j)),
                # Weight: full tiny block, constant index map (stays resident).
                pl.BlockSpec((c_out, c_in), lambda j, b: (0, 0)),
            ],
            # Boundary-tile writeback is masked to the true extent, so no
            # HBM-level pad/slice copies are needed.
            out_specs=pl.BlockSpec((None, c_out, tile_hw), lambda j, b: (b, 0, j)),
        ),
        compiler_params=pltpu.CompilerParams(
            dimension_semantics=("parallel", "parallel"),
            vmem_limit_bytes=vmem_limit,
        ),
        cost_estimate=cost,
    )(x3d, weight)

    return out3d.reshape(n, c_out, h, w)


if __name__ == "__main__":
    key = jax.random.PRNGKey(0)
    kx, kw = jax.random.split(key)

    # Small shapes consistent with the forward: NCHW input, Linear weight (C_out, C_in)
    N, C_IN, H, W = 2, 4, 16, 16
    C_OUT = 8

    x = jax.random.normal(kx, (N, C_IN, H, W), dtype=jnp.float32)
    # Deterministic "Linear"-style init (uniform in [-1/sqrt(C_in), 1/sqrt(C_in)])
    bound = 1.0 / (C_IN ** 0.5)
    weight = jax.random.uniform(
        kw, (C_OUT, C_IN), dtype=jnp.float32, minval=-bound, maxval=bound
    )

    # Reference: 1x1 conv == channel-mixing einsum
    ref = jnp.einsum("oc,nchw->nohw", weight, x)

    # f32 path (tight tolerance).
    out = jax.block_until_ready(ane_linear(x, weight))
    assert out.shape == (N, C_OUT, H, W)
    assert jnp.allclose(out, ref, atol=1e-5, rtol=1e-5)

    # bf16 compute + bf16 output path (loose tolerance; expected precision loss).
    out_bf16 = jax.block_until_ready(
        ane_linear(x, weight, compute_dtype=jnp.bfloat16, out_dtype=jnp.bfloat16)
    )
    assert out_bf16.shape == (N, C_OUT, H, W)
    assert jnp.allclose(out_bf16.astype(jnp.float32), ref, atol=3e-2, rtol=3e-2)

    print("KERNEL_OK")
</pallas_src>

<mosaic_0001>
module attributes {stable_mosaic.version = 11 : i64} {
  func.func @_ane_linear_kernel(%arg0: i32, %arg1: i32, %arg2: memref<1x4x256xf32, #tpu.memory_space<vmem>>, %arg3: memref<8x4xf32, #tpu.memory_space<vmem>>, %arg4: memref<1x8x256xf32, #tpu.memory_space<vmem>>) attributes {dimension_semantics = [#tpu.dimension_semantics<parallel>, #tpu.dimension_semantics<parallel>], iteration_bounds = array<i64: 1, 2>, scalar_prefetch = 0 : i64, scratch_operands = 0 : i64, tpu.core_type = #tpu.core_type<tc>, window_params = [{transform_indices = @transform_0, window_bounds = array<i64: 1, 4, 256>}, {pipeline_mode = #tpu.pipeline_mode<synchronous>, transform_indices = @transform_1, window_bounds = array<i64: 8, 4>}, {transform_indices = @transform_2, window_bounds = array<i64: 1, 8, 256>}]} {
    %c0 = arith.constant 0 : index
    %c0_0 = arith.constant 0 : index
    %0 = vector.load %arg3[%c0, %c0_0] : memref<8x4xf32, #tpu.memory_space<vmem>>, vector<8x4xf32>
    %c0_1 = arith.constant 0 : index
    %c0_2 = arith.constant 0 : index
    %c0_3 = arith.constant 0 : index
    %1 = vector.load %arg2[%c0_1, %c0_2, %c0_3] : memref<1x4x256xf32, #tpu.memory_space<vmem>>, vector<1x4x256xf32>
    %2 = vector.shape_cast %1 : vector<1x4x256xf32> to vector<4x256xf32>
    %cst = arith.constant dense<0.000000e+00> : vector<8x256xf32>
    %3 = tpu.matmul %0, %2, %cst {dimension_numbers = #tpu.dot_dimension_numbers<[1], [0], [0], [1], [0, 0, 1, 1], [], []>} : vector<8x4xf32>, vector<4x256xf32>, vector<8x256xf32> -> vector<8x256xf32>
    %c0_4 = arith.constant 0 : index
    %c0_5 = arith.constant 0 : index
    %c0_6 = arith.constant 0 : index
    %4 = vector.load %arg4[%c0_4, %c0_5, %c0_6] : memref<1x8x256xf32, #tpu.memory_space<vmem>>, vector<1x8x256xf32>
    %5 = vector.shape_cast %4 : vector<1x8x256xf32> to vector<8x256xf32>
    %6 = vector.shape_cast %3 : vector<8x256xf32> to vector<1x8x256xf32>
    tpu.vector_store %arg4[%c0_4, %c0_5, %c0_6], %6 {strides = array<i32>} : memref<1x8x256xf32, #tpu.memory_space<vmem>>, vector<1x8x256xf32>,
    return
  }
  func.func @transform_0(%arg0: i32, %arg1: i32) -> (i32, i32, i32) {
    %c0_i32 = arith.constant 0 : i32
    %c0_i32_0 = arith.constant 0 : i32
    return %arg1, %c0_i32, %arg0 : i32, i32, i32
  }
  func.func @transform_1(%arg0: i32, %arg1: i32) -> (i32, i32) {
    %c0_i32 = arith.constant 0 : i32
    %c0_i32_0 = arith.constant 0 : i32
    %c0_i32_1 = arith.constant 0 : i32
    return %c0_i32, %c0_i32_0 : i32, i32
  }
  func.func @transform_2(%arg0: i32, %arg1: i32) -> (i32, i32, i32) {
    %c0_i32 = arith.constant 0 : i32
    %c0_i32_0 = arith.constant 0 : i32
    return %arg1, %c0_i32, %arg0 : i32, i32, i32
  }
}

</mosaic_0001>

<llo_original>
// kernel: tpu_custom_call.1
$region0: #{tpu_custom_call.1}
  #allocation0 [shape = 'u32[]', space=smem, size = 0x4, offset = 0x4, fixed_abs, tag = 'smem constant byte address 0x4 - core index']
  #allocation1 [shape = 'u32[72,128]{1,0:T(1,128)}', space=vmem, size = 0x9000, scoped, tag = 'internal scratch']
  %s0 = inlined_call_operand.hbm [shape: f32[2,4,256], index: 0, kind: input, shape index: {}]
  %s1 = inlined_call_operand.vmem [shape: f32[8,4], index: 1, kind: input, shape index: {}]
  %s2 = inlined_call_operand.hbm [shape: f32[2,8,256], index: 2, kind: output, shape index: {}]
  %s3 = sld [smem:[#allocation0]]
  $region45: #{tpu_custom_call.1} parent=0
    _
  %s5 = ssub.s32 1, %s3
  %s6 = scalar_select 0, %s5, %s3
  $region1: #{tpu_custom_call.1} parent=0
    #allocation2 [shape = 'u8[8192]{0}', space=vmem, size = 0x2000, scoped, tag = 'input window, operand 0']
    #allocation3 [shape = 's32[2]{0}', space=sflag, size = 0x8, scoped, tag = 'scoped memory for tpu_custom_call.1']
    #allocation4 [shape = 's32[2]{0}', space=sflag, size = 0x8, scoped, tag = 'scoped memory for tpu_custom_call.1']
    #allocation5 [shape = 'u8[16384]{0}', space=vmem, size = 0x4000, scoped, tag = 'output window, operand 0']
    %7 = vsyncpa [#allocation3], 0
    %s8 = scalar_lea.sflag [#allocation3], 1
    %9 = vsyncpa %s8, 0
    %10 = vsyncpa [#allocation4], 0
    %s11 = scalar_lea.sflag [#allocation4], 1
    %12 = vsyncpa %s11, 0
    loop: start=0, step=1, limit=4
    $region2: #{tpu_custom_call.1} parent=1 // loop_pre_header
      _
    $region3: #{tpu_custom_call.1} parent=1 // loop_header
      %s14 = sphi 0, %s18
      %p15 = scmp.ge.s32.totalorder %s14, 4
      %s21 = sphi 0, %s33
      %s22 = sphi 0, %s29
      %s23 = sphi 0, %s21
      %s24 = sphi 0, %s22
      %s25 = sphi 0, %s23
      %s26 = sphi 0, %s24
      %s38 = sphi 0, %s40
      %s41 = sphi 0, %s38
      %s42 = sphi 0, %s41
      %s58 = sphi 0, %s42
      %s62 = sphi 0, %s62
      %s64 = sphi 0, %s62
      %s65 = sphi 0, %s64
      %s79 = sphi 0, %s65
      %s87 = sphi 0, %s89
      %s90 = sphi 0, %s87
      %s91 = sphi 0, %s90
      %s107 = sphi 0, %s91
    $region4: #{tpu_custom_call.1} parent=1 // loop_header_branch
      %17 = sbr.rel (%p15) target = $region8
    $region5: #{tpu_custom_call.1} parent=1 // loop_body
      %s19 = ssub.s32 %s14, 1
      %s20 = ssub.s32 %s14, 2
      %s27 = sadd.s32 1, %s22
      %p28 = scmp.ge.s32.totalorder %s27, 2
      %s29 = scalar_select %p28, 0, %s27
      %s30 = sadd.s32 1, %s21
      %s31 = scalar_select %p28, %s30, %s21
      %p32 = scmp.ge.s32.totalorder %s31, 1
      %s33 = scalar_select %p32, 0, %s31
      %s34 = ssub.s32 %s22, %s29
      %s35 = ssub.s32 %s21, %s33
      %s36 = sor.u32 %s34, %s35
      %p37 = scmp.eq.s32.totalorder %s36, 0
      %s39 = sadd.s32 %s38, 1
      %s40 = scalar_select %p37, %s38, %s39
      %p43 = pneg %p37
      %p44 = scmp.eq.s32.totalorder %s14, 1
      %p45 = por %p43, %p44
      %p46 = scmp.ne.s32.totalorder %s38, %s41
      %p47 = scmp.eq.s32.totalorder %s14, 0
      %p48 = por %p46, %p47
      %p49 = scmp.ne.s32.totalorder %s38, %s41
      %p50 = scmp.eq.s32.totalorder %s19, 1
      %p51 = por %p49, %p50
      %p52 = scmp.ne.s32.totalorder %s41, %s42
      %p53 = scmp.eq.s32.totalorder %s19, 0
      %p54 = por %p52, %p53
      %p55 = scmp.ne.s32.totalorder %s41, %s42
      %p56 = scmp.eq.s32.totalorder %s20, 1
      %p57 = por %p55, %p56
      %p59 = scmp.ne.s32.totalorder %s42, %s58
      %p60 = scmp.eq.s32.totalorder %s20, 0
      %p61 = por %p59, %p60
      %s63 = sadd.s32 %s62, 1
      %p66 = scmp.eq.s32.totalorder %s14, 1
      %p67 = scmp.ne.s32.totalorder %s62, %s64
      %p68 = scmp.eq.s32.totalorder %s14, 0
      %p69 = por %p67, %p68
      %p70 = scmp.ne.s32.totalorder %s62, %s64
      %p71 = scmp.eq.s32.totalorder %s19, 1
      %p72 = por %p70, %p71
      %p73 = scmp.ne.s32.totalorder %s64, %s65
      %p74 = scmp.eq.s32.totalorder %s19, 0
      %p75 = por %p73, %p74
      %p76 = scmp.ne.s32.totalorder %s64, %s65
      %p77 = scmp.eq.s32.totalorder %s20, 1
      %p78 = por %p76, %p77
      %p80 = scmp.ne.s32.totalorder %s65, %s79
      %p81 = scmp.eq.s32.totalorder %s20, 0
      %p82 = por %p80, %p81
      %s83 = ssub.s32 %s22, %s29
      %s84 = ssub.s32 %s21, %s33
      %s85 = sor.u32 %s83, %s84
      %p86 = scmp.eq.s32.totalorder %s85, 0
      %s88 = sadd.s32 %s87, 1
      %s89 = scalar_select %p86, %s87, %s88
      %p92 = pneg %p86
      %p93 = scmp.eq.s32.totalorder %s14, 1
      %p94 = por %p92, %p93
      %p95 = scmp.ne.s32.totalorder %s87, %s90
      %p96 = scmp.eq.s32.totalorder %s14, 0
      %p97 = por %p95, %p96
      %p98 = scmp.ne.s32.totalorder %s87, %s90
      %p99 = scmp.eq.s32.totalorder %s19, 1
      %p100 = por %p98, %p99
      %p101 = scmp.ne.s32.totalorder %s90, %s91
      %p102 = scmp.eq.s32.totalorder %s19, 0
      %p103 = por %p101, %p102
      %p104 = scmp.ne.s32.totalorder %s90, %s91
      %p105 = scmp.eq.s32.totalorder %s20, 1
      %p106 = por %p104, %p105
      %p108 = scmp.ne.s32.totalorder %s91, %s107
      %p109 = scmp.eq.s32.totalorder %s20, 0
      %p110 = por %p108, %p109
      %p111 = scmp.le.s32.totalorder 1, %s14
      %p112 = scmp.lt.s32.totalorder %s14, 3
      %p113 = pnand %p111, %p112
      %p114 = pneg %p113
      // Predicated region
      $region9: #{tpu_custom_call.1} parent=5 // pred_check
        _
      $region10: #{tpu_custom_call.1} parent=5 // pred_check_branch
        %116 = sbr.rel (%p113) target = $region12
      $region11: #{tpu_custom_call.1} parent=5 // pred_region
        %s117 = ssub.s32 %s14, 1
        // Predicated region
        $region13: #{tpu_custom_call.1} parent=11 // pred_check
          %p118 = pneg %p75
        $region14: #{tpu_custom_call.1} parent=11 // pred_check_branch
          %120 = sbr.rel (%p118) target = $region16
        $region15: #{tpu_custom_call.1} parent=11 // pred_region
          _
        $region16: #{tpu_custom_call.1} parent=11 // pred_fallthru
          _
      $region12: #{tpu_custom_call.1} parent=5 // pred_fallthru
        _
      %p121 = scmp.lt.s32.totalorder %s14, 2
      // Predicated region
      $region17: #{tpu_custom_call.1} parent=5 // pred_check
        %p122 = pneg %p121
      $region18: #{tpu_custom_call.1} parent=5 // pred_check_branch
        %124 = sbr.rel (%p122) target = $region20
      $region19: #{tpu_custom_call.1} parent=5 // pred_region
        // Predicated region
        $region21: #{tpu_custom_call.1} parent=19 // pred_check
          %p125 = pneg %p48
        $region22: #{tpu_custom_call.1} parent=19 // pred_check_branch
          %127 = sbr.rel (%p125) target = $region24
        $region23: #{tpu_custom_call.1} parent=19 // pred_region
          %s128 = sand.u32 %s38, 1
          %s129 = scalar_lea.sflag [#allocation3], %s128
          %s130 = sand.u32 %s38, 1
          %s131 = smul.addr %s130, 8
          %s132 = scalar_lea.vmem [#allocation2], %s131
          %s133 = smul.u32 2, %s21
          %135 = vsyncadd %s129, 0
          %s136 = smul.addr %s22, 2
          %s137 = sadd.s32 %s133, %s136
          %s138 = smul.addr %s137, 4
          %s139 = scalar_lea.hbm %s0, %s138
          %s141 = sshll.u32 %s139, 4
          %s142 = int_to_ptr.hbm [resolvable:$true] %s141
          %s143 = sshll.u32 %s132, 4
          %s144 = int_to_ptr.vmem [resolvable:$true] %s143
          %146 = dma.hbm_to_vmem [thread:$0]  %s142, 128, %s144, %s129
        $region24: #{tpu_custom_call.1} parent=19 // pred_fallthru
          _
      $region20: #{tpu_custom_call.1} parent=5 // pred_fallthru
        _
      %p147 = scmp.le.s32.totalorder 1, %s14
      %p148 = scmp.lt.s32.totalorder %s14, 3
      %p149 = pnand %p147, %p148
      %p150 = pneg %p149
      // Predicated region
      $region25: #{tpu_custom_call.1} parent=5 // pred_check
        _
      $region26: #{tpu_custom_call.1} parent=5 // pred_check_branch
        %152 = sbr.rel (%p149) target = $region28
      $region27: #{tpu_custom_call.1} parent=5 // pred_region
        %s153 = ssub.s32 %s14, 1
        %s154 = sand.u32 %s41, 1
        %s155 = scalar_lea.sflag [#allocation3], %s154
        %s156 = sand.u32 %s41, 1
        %s157 = smul.addr %s156, 8
        %s158 = scalar_lea.vmem [#allocation2], %s157
        // Predicated region
        $region29: #{tpu_custom_call.1} parent=27 // pred_check
          %p159 = pneg %p54
        $region30: #{tpu_custom_call.1} parent=27 // pred_check_branch
          %161 = sbr.rel (%p159) target = $region32
        $region31: #{tpu_custom_call.1} parent=27 // pred_region
          %163 = dma.done %s155, 128
        $region32: #{tpu_custom_call.1} parent=27 // pred_fallthru
          _
        %s164 = sand.u32 %s41, 1
        %s165 = scalar_lea.sflag [#allocation3], %s164
        %s166 = sand.u32 %s41, 1
        %s167 = smul.addr %s166, 8
        %s168 = scalar_lea.vmem [#allocation2], %s167
        %p169 = pneg %p54
        %p170 = pneg %p51
        %p171 = pneg %p75
        %p172 = pneg %p72
        %p173 = pneg %p103
        %p174 = pneg %p100
        %s175 = sand.u32 %s90, 1
        %s176 = scalar_lea.sflag [#allocation4], %s175
        %s177 = sand.u32 %s90, 1
        %s178 = smul.addr %s177, 16
        %s179 = scalar_lea.vmem [#allocation5], %s178
        %s180 = smul.u32 2, %s23
        %s181 = smul.u32 2, %s23
        %v182 = vld [vmem:[%s1] sm:$0xff]
        %v183 = vld [vmem:[%s158] sm:$0xff]
        %185 = vst [vmem:[#allocation1] ss:$2 sm:$0xff] %v183
        %v186 = vld.sshfl [vmem:[#allocation1] sm:$0xff pattern:$0x75316420]
        %v187 = vld.sshfl [vmem:[#allocation1 + $0x8] sm:$0xff pattern:$0x75316420]
        %vm188 = vcmask 31744
        %v190 = vsel %vm188, %v182, 0
        %vm192 = vcmask 1043456
        %v193 = vsel %vm192, %v186, 0
        %v195 = vsel %vm192, %v187, 0
        %197 = vmatpush.msra.mxu0 0.0
        %198 = vmatpush.msra.mxu0 0.0
        %199 = vmatpush.msra.mxu0 0.0
        %200 = vmatpush.msra.mxu0 0.0
        %201 = vmatpush.msra.mxu0 0.0
        %202 = vmatpush.msra.mxu0 0.0
        %203 = vmatpush.msra.mxu0 0.0
        %204 = vmatpush.msra.mxu0 0.0
        %205 = vmatpush.msra.mxu0 0.0
        %206 = vmatpush.msra.mxu0 0.0
        %207 = vmatpush.msra.mxu0 0.0
        %208 = vmatpush.msra.mxu0 0.0
        %209 = vmatpush.msra.mxu0 0.0
        %210 = vmatpush.msra.mxu0 0.0
        %211 = vmatpush.msra.mxu0 0.0
        %212 = vmatpush.msra.mxu0 %v193
        %213 = vmatmul.f32.gmra.mxu0 %v190
        %v214 = vpop.f32.mrf.mxu0
        %v215 = vadd.f32 0.0, %v214
        %216 = vdwg.mxu0
        %217 = vmatpush.msra.mxu0 0.0
        %218 = vmatpush.msra.mxu0 0.0
        %219 = vmatpush.msra.mxu0 0.0
        %220 = vmatpush.msra.mxu0 0.0
        %221 = vmatpush.msra.mxu0 0.0
        %222 = vmatpush.msra.mxu0 0.0
        %223 = vmatpush.msra.mxu0 0.0
        %224 = vmatpush.msra.mxu0 0.0
        %225 = vmatpush.msra.mxu0 0.0
        %226 = vmatpush.msra.mxu0 0.0
        %227 = vmatpush.msra.mxu0 0.0
        %228 = vmatpush.msra.mxu0 0.0
        %229 = vmatpush.msra.mxu0 0.0
        %230 = vmatpush.msra.mxu0 0.0
        %231 = vmatpush.msra.mxu0 0.0
        %232 = vmatpush.msra.mxu0 %v195
        %233 = vmatmul.f32.gmra.mxu0 %v190
        %v234 = vpop.f32.mrf.mxu0
        %v235 = vadd.f32 0.0, %v234
        %236 = vdwg.mxu0
        %237 = vst [vmem:[%s179] sm:$0xff] %v215
        %238 = vst [vmem:[%s179 + $0x8] sm:$0xff] %v235
        %s239 = sand.u32 %s90, 1
        %s240 = scalar_lea.sflag [#allocation4], %s239
        %s241 = sand.u32 %s90, 1
        %s242 = smul.addr %s241, 16
        %s243 = scalar_lea.vmem [#allocation5], %s242
        // Predicated region
        $region33: #{tpu_custom_call.1} parent=27 // pred_check
          %p244 = pneg %p100
        $region34: #{tpu_custom_call.1} parent=27 // pred_check_branch
          %246 = sbr.rel (%p244) target = $region36
        $region35: #{tpu_custom_call.1} parent=27 // pred_region
          %s247 = smul.u32 2, %s23
          %249 = vsyncadd %s240, 0
          %s250 = smul.addr %s24, 2
          %s251 = sadd.s32 %s247, %s250
          %s252 = smul.addr %s251, 8
          %s253 = scalar_lea.hbm %s2, %s252
          %s255 = sshll.u32 %s243, 4
          %s256 = int_to_ptr.vmem [resolvable:$true] %s255
          %s257 = sshll.u32 %s253, 4
          %s258 = int_to_ptr.hbm [resolvable:$true] %s257
          %260 = dma.vmem_to_hbm [thread:$0]  %s256, 256, %s258, %s240
        $region36: #{tpu_custom_call.1} parent=27 // pred_fallthru
          _
      $region28: #{tpu_custom_call.1} parent=5 // pred_fallthru
        _
      %p261 = scmp.le.s32.totalorder 2, %s14
      // Predicated region
      $region37: #{tpu_custom_call.1} parent=5 // pred_check
        %p262 = pneg %p261
      $region38: #{tpu_custom_call.1} parent=5 // pred_check_branch
        %264 = sbr.rel (%p262) target = $region40
      $region39: #{tpu_custom_call.1} parent=5 // pred_region
        %s265 = ssub.s32 %s14, 2
        // Predicated region
        $region41: #{tpu_custom_call.1} parent=39 // pred_check
          %p266 = pneg %p106
        $region42: #{tpu_custom_call.1} parent=39 // pred_check_branch
          %268 = sbr.rel (%p266) target = $region44
        $region43: #{tpu_custom_call.1} parent=39 // pred_region
          %s269 = sand.u32 %s91, 1
          %s270 = scalar_lea.sflag [#allocation4], %s269
          %s271 = sand.u32 %s91, 1
          %s272 = smul.addr %s271, 16
          %s273 = scalar_lea.vmem [#allocation5], %s272
          %275 = dma.done %s270, 256
        $region44: #{tpu_custom_call.1} parent=39 // pred_fallthru
          _
      $region40: #{tpu_custom_call.1} parent=5 // pred_fallthru
        _
    $region6: #{tpu_custom_call.1} parent=1 // loop_footer
      %s18 = sadd.s32 1, %s14
    $region7: #{tpu_custom_call.1} parent=1 // loop_footer_branch
      %13 = sbr.rel target = $region3
    $region8: #{tpu_custom_call.1} parent=1 // loop_exit
      _
    %276 = vsyncpa [#allocation3], 1
    %s277 = scalar_lea.sflag [#allocation3], 1
    %278 = vsyncpa %s277, 1
    %279 = vsyncpa [#allocation4], 1
    %s280 = scalar_lea.sflag [#allocation4], 1
    %281 = vsyncpa %s280, 1

</llo_original>
